<compile_context>
chip_gen: v7x
topology: tpu7x:2x2x1
jax: 0.10.0
libtpu: 0.0.40
codegen_flags: <defaults>
</compile_context>

<pallas_src>
import math

import jax
import jax.numpy as jnp
from jax.experimental import pallas as pl
from jax.experimental.pallas import tpu as pltpu

SUBLANE = 8
LANE = 128

_VMEM = pl.BlockSpec(memory_space=pltpu.MemorySpace.VMEM)


def _round_up(n, m):
    return (n + m - 1) // m * m


# ---------------------------------------------------------------------------
# Fused kernel: whole 6-layer forward in one invocation
# ---------------------------------------------------------------------------
def fused_gcn_kernel(x_ref, adj_ref,
                     w1_ref, b1_ref, w2_ref, b2_ref, w3_ref, b3_ref,
                     w4_ref, b4_ref, w5_ref, b5_ref, w6_ref, b6_ref,
                     o_ref, h_a, h_b):
    # adj loaded (already bf16) once and reused for gc1/gc2/gc3.
    adj = adj_ref[...]

    def gcn_layer(h_bf16, w_ref, b_ref):
        # (x @ W_t + b) in f32 accumulate, then adj-aggregate, then ReLU.
        xw = jnp.dot(h_bf16, w_ref[...], preferred_element_type=jnp.float32)
        xw = xw + b_ref[...]                       # b is (1, F_pad) -> row bcast
        agg = jnp.dot(adj, xw.astype(jnp.bfloat16),
                      preferred_element_type=jnp.float32)
        return jnp.maximum(agg, 0.0)

    def perc_layer(h_bf16, w_ref, b_ref, relu):
        y = jnp.dot(h_bf16, w_ref[...], preferred_element_type=jnp.float32)
        y = y + b_ref[...]
        return jnp.maximum(y, 0.0) if relu else y

    # Intermediates ping-pong between two VMEM scratch buffers (f32).
    h_a[...] = gcn_layer(x_ref[...], w1_ref, b1_ref)
    h_b[...] = gcn_layer(h_a[...].astype(jnp.bfloat16), w2_ref, b2_ref)
    h_a[...] = gcn_layer(h_b[...].astype(jnp.bfloat16), w3_ref, b3_ref)
    h_b[...] = perc_layer(h_a[...].astype(jnp.bfloat16), w4_ref, b4_ref, True)
    h_a[...] = perc_layer(h_b[...].astype(jnp.bfloat16), w5_ref, b5_ref, True)
    o_ref[...] = perc_layer(h_a[...].astype(jnp.bfloat16), w6_ref, b6_ref, False)


# ---------------------------------------------------------------------------
# Wrapper: pad to lane/sublane-friendly shapes, single pallas_call, slice back
# ---------------------------------------------------------------------------
def gcn_forward(x, adj, params):
    # TODO(synk): F.dropout with training=True is stochastic; eval-mode
    # semantics (identity) are used here, matching model.eval() inference.
    n, nfeat = x.shape
    nclass = params[-1][0].shape[1]

    feat_dims = [nfeat] + [w.shape[1] for (w, _) in params]
    f_pad = _round_up(max(feat_dims), LANE)      # lane-dense feature width
    n_pad = _round_up(n, SUBLANE)                # sublane-aligned row count

    def pad2(a, rows, cols, dtype):
        r, c = a.shape
        return jnp.pad(a, ((0, rows - r), (0, cols - c))).astype(dtype)

    # bf16 matmul operands (halves DMA + vreg footprint); biases stay f32.
    x_p = pad2(x, n_pad, f_pad, jnp.bfloat16)
    adj_p = pad2(adj, n_pad, n_pad, jnp.bfloat16)

    flat_inputs = [x_p, adj_p]
    for w_t, b in params:
        flat_inputs.append(pad2(w_t, f_pad, f_pad, jnp.bfloat16))
        flat_inputs.append(pad2(b, 1, f_pad, jnp.float32))

    out_p = pl.pallas_call(
        fused_gcn_kernel,
        out_shape=jax.ShapeDtypeStruct((n_pad, f_pad), jnp.float32),
        in_specs=[_VMEM] * len(flat_inputs),
        out_specs=_VMEM,
        scratch_shapes=[
            pltpu.VMEM((n_pad, f_pad), jnp.float32),   # ping
            pltpu.VMEM((n_pad, f_pad), jnp.float32),   # pong
        ],
    )(*flat_inputs)
    return out_p[:n, :nclass]


# ---------------------------------------------------------------------------
# Parameter init (deterministic, mimics torch.nn.Linear default init bounds)
# ---------------------------------------------------------------------------
def init_linear(key, in_features, out_features):
    kw, kb = jax.random.split(key)
    bound = 1.0 / math.sqrt(in_features)
    # Stored already transposed: [in, out]
    w_t = jax.random.uniform(
        kw, (in_features, out_features), jnp.float32, -bound, bound
    )
    b = jax.random.uniform(kb, (1, out_features), jnp.float32, -bound, bound)
    return w_t, b


if __name__ == "__main__":
    # Small, module-consistent shapes.
    N = 64          # number of nodes
    nfeat = 32
    nhid_1, nhid_2, nhid_3, nhid_4, nhid_5 = 32, 32, 32, 32, 32
    nclass = 8

    key = jax.random.PRNGKey(0)
    kx, kadj, k1, k2, k3, k4, k5, k6 = jax.random.split(key, 8)

    x = jax.random.normal(kx, (N, nfeat), jnp.float32)

    # Symmetric, row-normalized dense adjacency with self-loops.
    a = (jax.random.uniform(kadj, (N, N)) < 0.1).astype(jnp.float32)
    a = jnp.maximum(a, a.T) + jnp.eye(N, dtype=jnp.float32)
    adj = a / jnp.sum(a, axis=1, keepdims=True)

    params = (
        init_linear(k1, nfeat, nhid_1),
        init_linear(k2, nhid_1, nhid_2),
        init_linear(k3, nhid_2, nhid_3),
        init_linear(k4, nhid_3, nhid_4),
        init_linear(k5, nhid_4, nhid_5),
        init_linear(k6, nhid_5, nclass),
    )

    out = jax.jit(gcn_forward)(x, adj, params)
    jax.block_until_ready(out)
    assert out.shape == (N, nclass), out.shape

    # Reference mirroring the kernel's bf16-operand / f32-accumulate math.
    def ref_bf16(x, adj, params):
        bf = lambda t: t.astype(jnp.bfloat16)
        h = x
        for w, b in params[:3]:
            xw = jnp.dot(bf(h), bf(w), preferred_element_type=jnp.float32) + b
            h = jnp.maximum(
                jnp.dot(bf(adj), bf(xw), preferred_element_type=jnp.float32), 0.0)
        for w, b in params[3:5]:
            h = jnp.maximum(
                jnp.dot(bf(h), bf(w), preferred_element_type=jnp.float32) + b, 0.0)
        w, b = params[5]
        return jnp.dot(bf(h), bf(w), preferred_element_type=jnp.float32) + b

    ref_out = ref_bf16(x, adj, params)
    assert jnp.allclose(out, ref_out, atol=1e-2, rtol=1e-2)

    # Loose check against the pure-f32 reference (semantic sanity).
    def ref_f32(x, adj, params):
        h = x
        for w, b in params[:3]:
            h = jnp.maximum(adj @ (h @ w + b), 0.0)
        for w, b in params[3:5]:
            h = jnp.maximum(h @ w + b, 0.0)
        w, b = params[5]
        return h @ w + b

    assert jnp.allclose(out, ref_f32(x, adj, params), atol=1e-1, rtol=1e-1)

    print("KERNEL_OK")
</pallas_src>

<mosaic_0001>
module attributes {stable_mosaic.version = 11 : i64} {
  func.func @fused_gcn_kernel(%arg0: memref<64x128xbf16, #tpu.memory_space<vmem>>, %arg1: memref<64x64xbf16, #tpu.memory_space<vmem>>, %arg2: memref<128x128xbf16, #tpu.memory_space<vmem>>, %arg3: memref<1x128xf32, #tpu.memory_space<vmem>>, %arg4: memref<128x128xbf16, #tpu.memory_space<vmem>>, %arg5: memref<1x128xf32, #tpu.memory_space<vmem>>, %arg6: memref<128x128xbf16, #tpu.memory_space<vmem>>, %arg7: memref<1x128xf32, #tpu.memory_space<vmem>>, %arg8: memref<128x128xbf16, #tpu.memory_space<vmem>>, %arg9: memref<1x128xf32, #tpu.memory_space<vmem>>, %arg10: memref<128x128xbf16, #tpu.memory_space<vmem>>, %arg11: memref<1x128xf32, #tpu.memory_space<vmem>>, %arg12: memref<128x128xbf16, #tpu.memory_space<vmem>>, %arg13: memref<1x128xf32, #tpu.memory_space<vmem>>, %arg14: memref<64x128xf32, #tpu.memory_space<vmem>>, %arg15: memref<64x128xf32, #tpu.memory_space<vmem>>, %arg16: memref<64x128xf32, #tpu.memory_space<vmem>>) attributes {dimension_semantics = [], scalar_prefetch = 0 : i64, scratch_operands = 2 : i64, tpu.core_type = #tpu.core_type<tc>} {
    %c0 = arith.constant 0 : index
    %c0_0 = arith.constant 0 : index
    %0 = vector.load %arg1[%c0, %c0_0] : memref<64x64xbf16, #tpu.memory_space<vmem>>, vector<64x64xbf16>
    %c0_1 = arith.constant 0 : index
    %c0_2 = arith.constant 0 : index
    %1 = vector.load %arg0[%c0_1, %c0_2] : memref<64x128xbf16, #tpu.memory_space<vmem>>, vector<64x128xbf16>
    %c0_3 = arith.constant 0 : index
    %c0_4 = arith.constant 0 : index
    %2 = vector.load %arg2[%c0_3, %c0_4] : memref<128x128xbf16, #tpu.memory_space<vmem>>, vector<128x128xbf16>
    %cst = arith.constant dense<0.000000e+00> : vector<64x128xf32>
    %3 = tpu.matmul %1, %2, %cst {dimension_numbers = #tpu.dot_dimension_numbers<[1], [0], [0], [1], [0, 0, 1, 1], [], []>} : vector<64x128xbf16>, vector<128x128xbf16>, vector<64x128xf32> -> vector<64x128xf32>
    %c0_5 = arith.constant 0 : index
    %c0_6 = arith.constant 0 : index
    %4 = vector.load %arg3[%c0_5, %c0_6] : memref<1x128xf32, #tpu.memory_space<vmem>>, vector<1x128xf32>
    %5 = vector.broadcast %4 : vector<1x128xf32> to vector<64x128xf32>
    %6 = arith.addf %3, %5 : vector<64x128xf32>
    %7 = arith.truncf %6 : vector<64x128xf32> to vector<64x128xbf16>
    %cst_7 = arith.constant dense<0.000000e+00> : vector<64x128xf32>
    %8 = tpu.matmul %0, %7, %cst_7 {dimension_numbers = #tpu.dot_dimension_numbers<[1], [0], [0], [1], [0, 0, 1, 1], [], []>} : vector<64x64xbf16>, vector<64x128xbf16>, vector<64x128xf32> -> vector<64x128xf32>
    %cst_8 = arith.constant 0.000000e+00 : f32
    %9 = vector.broadcast %cst_8 : f32 to vector<64x128xf32>
    %10 = arith.maximumf %8, %9 : vector<64x128xf32>
    %c0_9 = arith.constant 0 : index
    %c0_10 = arith.constant 0 : index
    %11 = vector.load %arg15[%c0_9, %c0_10] : memref<64x128xf32, #tpu.memory_space<vmem>>, vector<64x128xf32>
    tpu.vector_store %arg15[%c0_9, %c0_10], %10 {strides = array<i32>} : memref<64x128xf32, #tpu.memory_space<vmem>>, vector<64x128xf32>,
    %c0_11 = arith.constant 0 : index
    %c0_12 = arith.constant 0 : index
    %12 = vector.load %arg15[%c0_11, %c0_12] : memref<64x128xf32, #tpu.memory_space<vmem>>, vector<64x128xf32>
    %13 = arith.truncf %12 : vector<64x128xf32> to vector<64x128xbf16>
    %c0_13 = arith.constant 0 : index
    %c0_14 = arith.constant 0 : index
    %14 = vector.load %arg4[%c0_13, %c0_14] : memref<128x128xbf16, #tpu.memory_space<vmem>>, vector<128x128xbf16>
    %cst_15 = arith.constant dense<0.000000e+00> : vector<64x128xf32>
    %15 = tpu.matmul %13, %14, %cst_15 {dimension_numbers = #tpu.dot_dimension_numbers<[1], [0], [0], [1], [0, 0, 1, 1], [], []>} : vector<64x128xbf16>, vector<128x128xbf16>, vector<64x128xf32> -> vector<64x128xf32>
    %c0_16 = arith.constant 0 : index
    %c0_17 = arith.constant 0 : index
    %16 = vector.load %arg5[%c0_16, %c0_17] : memref<1x128xf32, #tpu.memory_space<vmem>>, vector<1x128xf32>
    %17 = vector.broadcast %16 : vector<1x128xf32> to vector<64x128xf32>
    %18 = arith.addf %15, %17 : vector<64x128xf32>
    %19 = arith.truncf %18 : vector<64x128xf32> to vector<64x128xbf16>
    %cst_18 = arith.constant dense<0.000000e+00> : vector<64x128xf32>
    %20 = tpu.matmul %0, %19, %cst_18 {dimension_numbers = #tpu.dot_dimension_numbers<[1], [0], [0], [1], [0, 0, 1, 1], [], []>} : vector<64x64xbf16>, vector<64x128xbf16>, vector<64x128xf32> -> vector<64x128xf32>
    %cst_19 = arith.constant 0.000000e+00 : f32
    %21 = vector.broadcast %cst_19 : f32 to vector<64x128xf32>
    %22 = arith.maximumf %20, %21 : vector<64x128xf32>
    %c0_20 = arith.constant 0 : index
    %c0_21 = arith.constant 0 : index
    %23 = vector.load %arg16[%c0_20, %c0_21] : memref<64x128xf32, #tpu.memory_space<vmem>>, vector<64x128xf32>
    tpu.vector_store %arg16[%c0_20, %c0_21], %22 {strides = array<i32>} : memref<64x128xf32, #tpu.memory_space<vmem>>, vector<64x128xf32>,
    %c0_22 = arith.constant 0 : index
    %c0_23 = arith.constant 0 : index
    %24 = vector.load %arg16[%c0_22, %c0_23] : memref<64x128xf32, #tpu.memory_space<vmem>>, vector<64x128xf32>
    %25 = arith.truncf %24 : vector<64x128xf32> to vector<64x128xbf16>
    %c0_24 = arith.constant 0 : index
    %c0_25 = arith.constant 0 : index
    %26 = vector.load %arg6[%c0_24, %c0_25] : memref<128x128xbf16, #tpu.memory_space<vmem>>, vector<128x128xbf16>
    %cst_26 = arith.constant dense<0.000000e+00> : vector<64x128xf32>
    %27 = tpu.matmul %25, %26, %cst_26 {dimension_numbers = #tpu.dot_dimension_numbers<[1], [0], [0], [1], [0, 0, 1, 1], [], []>} : vector<64x128xbf16>, vector<128x128xbf16>, vector<64x128xf32> -> vector<64x128xf32>
    %c0_27 = arith.constant 0 : index
    %c0_28 = arith.constant 0 : index
    %28 = vector.load %arg7[%c0_27, %c0_28] : memref<1x128xf32, #tpu.memory_space<vmem>>, vector<1x128xf32>
    %29 = vector.broadcast %28 : vector<1x128xf32> to vector<64x128xf32>
    %30 = arith.addf %27, %29 : vector<64x128xf32>
    %31 = arith.truncf %30 : vector<64x128xf32> to vector<64x128xbf16>
    %cst_29 = arith.constant dense<0.000000e+00> : vector<64x128xf32>
    %32 = tpu.matmul %0, %31, %cst_29 {dimension_numbers = #tpu.dot_dimension_numbers<[1], [0], [0], [1], [0, 0, 1, 1], [], []>} : vector<64x64xbf16>, vector<64x128xbf16>, vector<64x128xf32> -> vector<64x128xf32>
    %cst_30 = arith.constant 0.000000e+00 : f32
    %33 = vector.broadcast %cst_30 : f32 to vector<64x128xf32>
    %34 = arith.maximumf %32, %33 : vector<64x128xf32>
    %c0_31 = arith.constant 0 : index
    %c0_32 = arith.constant 0 : index
    %35 = vector.load %arg15[%c0_31, %c0_32] : memref<64x128xf32, #tpu.memory_space<vmem>>, vector<64x128xf32>
    tpu.vector_store %arg15[%c0_31, %c0_32], %34 {strides = array<i32>} : memref<64x128xf32, #tpu.memory_space<vmem>>, vector<64x128xf32>,
    %c0_33 = arith.constant 0 : index
    %c0_34 = arith.constant 0 : index
    %36 = vector.load %arg15[%c0_33, %c0_34] : memref<64x128xf32, #tpu.memory_space<vmem>>, vector<64x128xf32>
    %37 = arith.truncf %36 : vector<64x128xf32> to vector<64x128xbf16>
    %c0_35 = arith.constant 0 : index
    %c0_36 = arith.constant 0 : index
    %38 = vector.load %arg8[%c0_35, %c0_36] : memref<128x128xbf16, #tpu.memory_space<vmem>>, vector<128x128xbf16>
    %cst_37 = arith.constant dense<0.000000e+00> : vector<64x128xf32>
    %39 = tpu.matmul %37, %38, %cst_37 {dimension_numbers = #tpu.dot_dimension_numbers<[1], [0], [0], [1], [0, 0, 1, 1], [], []>} : vector<64x128xbf16>, vector<128x128xbf16>, vector<64x128xf32> -> vector<64x128xf32>
    %c0_38 = arith.constant 0 : index
    %c0_39 = arith.constant 0 : index
    %40 = vector.load %arg9[%c0_38, %c0_39] : memref<1x128xf32, #tpu.memory_space<vmem>>, vector<1x128xf32>
    %41 = vector.broadcast %40 : vector<1x128xf32> to vector<64x128xf32>
    %42 = arith.addf %39, %41 : vector<64x128xf32>
    %cst_40 = arith.constant 0.000000e+00 : f32
    %43 = vector.broadcast %cst_40 : f32 to vector<64x128xf32>
    %44 = arith.maximumf %42, %43 : vector<64x128xf32>
    %c0_41 = arith.constant 0 : index
    %c0_42 = arith.constant 0 : index
    %45 = vector.load %arg16[%c0_41, %c0_42] : memref<64x128xf32, #tpu.memory_space<vmem>>, vector<64x128xf32>
    tpu.vector_store %arg16[%c0_41, %c0_42], %44 {strides = array<i32>} : memref<64x128xf32, #tpu.memory_space<vmem>>, vector<64x128xf32>,
    %c0_43 = arith.constant 0 : index
    %c0_44 = arith.constant 0 : index
    %46 = vector.load %arg16[%c0_43, %c0_44] : memref<64x128xf32, #tpu.memory_space<vmem>>, vector<64x128xf32>
    %47 = arith.truncf %46 : vector<64x128xf32> to vector<64x128xbf16>
    %c0_45 = arith.constant 0 : index
    %c0_46 = arith.constant 0 : index
    %48 = vector.load %arg10[%c0_45, %c0_46] : memref<128x128xbf16, #tpu.memory_space<vmem>>, vector<128x128xbf16>
    %cst_47 = arith.constant dense<0.000000e+00> : vector<64x128xf32>
    %49 = tpu.matmul %47, %48, %cst_47 {dimension_numbers = #tpu.dot_dimension_numbers<[1], [0], [0], [1], [0, 0, 1, 1], [], []>} : vector<64x128xbf16>, vector<128x128xbf16>, vector<64x128xf32> -> vector<64x128xf32>
    %c0_48 = arith.constant 0 : index
    %c0_49 = arith.constant 0 : index
    %50 = vector.load %arg11[%c0_48, %c0_49] : memref<1x128xf32, #tpu.memory_space<vmem>>, vector<1x128xf32>
    %51 = vector.broadcast %50 : vector<1x128xf32> to vector<64x128xf32>
    %52 = arith.addf %49, %51 : vector<64x128xf32>
    %cst_50 = arith.constant 0.000000e+00 : f32
    %53 = vector.broadcast %cst_50 : f32 to vector<64x128xf32>
    %54 = arith.maximumf %52, %53 : vector<64x128xf32>
    %c0_51 = arith.constant 0 : index
    %c0_52 = arith.constant 0 : index
    %55 = vector.load %arg15[%c0_51, %c0_52] : memref<64x128xf32, #tpu.memory_space<vmem>>, vector<64x128xf32>
    tpu.vector_store %arg15[%c0_51, %c0_52], %54 {strides = array<i32>} : memref<64x128xf32, #tpu.memory_space<vmem>>, vector<64x128xf32>,
    %c0_53 = arith.constant 0 : index
    %c0_54 = arith.constant 0 : index
    %56 = vector.load %arg15[%c0_53, %c0_54] : memref<64x128xf32, #tpu.memory_space<vmem>>, vector<64x128xf32>
    %57 = arith.truncf %56 : vector<64x128xf32> to vector<64x128xbf16>
    %c0_55 = arith.constant 0 : index
    %c0_56 = arith.constant 0 : index
    %58 = vector.load %arg12[%c0_55, %c0_56] : memref<128x128xbf16, #tpu.memory_space<vmem>>, vector<128x128xbf16>
    %cst_57 = arith.constant dense<0.000000e+00> : vector<64x128xf32>
    %59 = tpu.matmul %57, %58, %cst_57 {dimension_numbers = #tpu.dot_dimension_numbers<[1], [0], [0], [1], [0, 0, 1, 1], [], []>} : vector<64x128xbf16>, vector<128x128xbf16>, vector<64x128xf32> -> vector<64x128xf32>
    %c0_58 = arith.constant 0 : index
    %c0_59 = arith.constant 0 : index
    %60 = vector.load %arg13[%c0_58, %c0_59] : memref<1x128xf32, #tpu.memory_space<vmem>>, vector<1x128xf32>
    %61 = vector.broadcast %60 : vector<1x128xf32> to vector<64x128xf32>
    %62 = arith.addf %59, %61 : vector<64x128xf32>
    %c0_60 = arith.constant 0 : index
    %c0_61 = arith.constant 0 : index
    %63 = vector.load %arg14[%c0_60, %c0_61] : memref<64x128xf32, #tpu.memory_space<vmem>>, vector<64x128xf32>
    tpu.vector_store %arg14[%c0_60, %c0_61], %62 {strides = array<i32>} : memref<64x128xf32, #tpu.memory_space<vmem>>, vector<64x128xf32>,
    return
  }
}

</mosaic_0001>

<llo_original>
// kernel: gcn_forward.1
$region0: #{gcn_forward.1}
  #allocation0 [shape = 'u32[]', space=smem, size = 0x4, offset = 0x4, fixed_abs, tag = 'smem constant byte address 0x4 - core index']
  #allocation1 [shape = 'u32[144,128]{1,0:T(1,128)}', space=vmem, size = 0x12000, scoped, tag = 'internal scratch']
  #allocation2 [shape = 'f32[64,128]{1,0:T(8,128)}', space=vmem, size = 0x8000, scoped, tag = 'scratch operand']
  #allocation3 [shape = 'f32[64,128]{1,0:T(8,128)}', space=vmem, size = 0x8000, scoped, tag = 'scratch operand']
  %s0 = inlined_call_operand.vmem [shape: bf16[64,128], index: 0, kind: input, shape index: {}]
  %s1 = inlined_call_operand.vmem [shape: bf16[64,64], index: 1, kind: input, shape index: {}]
  %s2 = inlined_call_operand.vmem [shape: bf16[128,128], index: 2, kind: input, shape index: {}]
  %s3 = inlined_call_operand.vmem [shape: f32[1,128], index: 3, kind: input, shape index: {}]
  %s4 = inlined_call_operand.vmem [shape: bf16[128,128], index: 4, kind: input, shape index: {}]
  %s5 = inlined_call_operand.vmem [shape: f32[1,128], index: 5, kind: input, shape index: {}]
  %s6 = inlined_call_operand.vmem [shape: bf16[128,128], index: 6, kind: input, shape index: {}]
  %s7 = inlined_call_operand.vmem [shape: f32[1,128], index: 7, kind: input, shape index: {}]
  %s8 = inlined_call_operand.vmem [shape: bf16[128,128], index: 8, kind: input, shape index: {}]
  %s9 = inlined_call_operand.vmem [shape: f32[1,128], index: 9, kind: input, shape index: {}]
  %s10 = inlined_call_operand.vmem [shape: bf16[128,128], index: 10, kind: input, shape index: {}]
  %s11 = inlined_call_operand.vmem [shape: f32[1,128], index: 11, kind: input, shape index: {}]
  %s12 = inlined_call_operand.vmem [shape: bf16[128,128], index: 12, kind: input, shape index: {}]
  %s13 = inlined_call_operand.vmem [shape: f32[1,128], index: 13, kind: input, shape index: {}]
  %s14 = inlined_call_operand.vmem [shape: f32[64,128], index: 14, kind: output, shape index: {}]
  %s15 = sld [smem:[#allocation0]]
  $region66: #{gcn_forward.1} parent=0
    _
  %s17 = ssub.s32 1, %s15
  %s18 = scalar_select 0, %s17, %s15
  // Predicated region
  $region2: #{gcn_forward.1} parent=0 // pred_check
    _
  $region3: #{gcn_forward.1} parent=0 // pred_check_branch
    %20 = sbr.rel (0) target = $region5
  $region4: #{gcn_forward.1} parent=0 // pred_region
    _
  $region5: #{gcn_forward.1} parent=0 // pred_fallthru
    _
  // Predicated region
  $region6: #{gcn_forward.1} parent=0 // pred_check
    _
  $region7: #{gcn_forward.1} parent=0 // pred_check_branch
    %22 = sbr.rel (0) target = $region9
  $region8: #{gcn_forward.1} parent=0 // pred_region
    _
  $region9: #{gcn_forward.1} parent=0 // pred_fallthru
    _
  // Predicated region
  $region10: #{gcn_forward.1} parent=0 // pred_check
    _
  $region11: #{gcn_forward.1} parent=0 // pred_check_branch
    %24 = sbr.rel (0) target = $region13
  $region12: #{gcn_forward.1} parent=0 // pred_region
    _
  $region13: #{gcn_forward.1} parent=0 // pred_fallthru
    _
  // Predicated region
  $region14: #{gcn_forward.1} parent=0 // pred_check
    _
  $region15: #{gcn_forward.1} parent=0 // pred_check_branch
    %26 = sbr.rel (0) target = $region17
  $region16: #{gcn_forward.1} parent=0 // pred_region
    _
  $region17: #{gcn_forward.1} parent=0 // pred_fallthru
    _
  // Predicated region
  $region18: #{gcn_forward.1} parent=0 // pred_check
    _
  $region19: #{gcn_forward.1} parent=0 // pred_check_branch
    %28 = sbr.rel (0) target = $region21
  $region20: #{gcn_forward.1} parent=0 // pred_region
    _
  $region21: #{gcn_forward.1} parent=0 // pred_fallthru
    _
  // Predicated region
  $region22: #{gcn_forward.1} parent=0 // pred_check
    _
  $region23: #{gcn_forward.1} parent=0 // pred_check_branch
    %30 = sbr.rel (0) target = $region25
  $region24: #{gcn_forward.1} parent=0 // pred_region
    _
  $region25: #{gcn_forward.1} parent=0 // pred_fallthru
    _
  // Predicated region
  $region26: #{gcn_forward.1} parent=0 // pred_check
    _
  $region27: #{gcn_forward.1} parent=0 // pred_check_branch
    %32 = sbr.rel (0) target = $region29
  $region28: #{gcn_forward.1} parent=0 // pred_region
    _
  $region29: #{gcn_forward.1} parent=0 // pred_fallthru
    _
  // Predicated region
  $region30: #{gcn_forward.1} parent=0 // pred_check
    _
  $region31: #{gcn_forward.1} parent=0 // pred_check_branch
    %34 = sbr.rel (0) target = $region33
  $region32: #{gcn_forward.1} parent=0 // pred_region
    _
  $region33: #{gcn_forward.1} parent=0 // pred_fallthru
    _
  // Predicated region
  $region34: #{gcn_forward.1} parent=0 // pred_check
    _
  $region35: #{gcn_forward.1} parent=0 // pred_check_branch
    %36 = sbr.rel (0) target = $region37
  $region36: #{gcn_forward.1} parent=0 // pred_region
    _
  $region37: #{gcn_forward.1} parent=0 // pred_fallthru
    _
  // Predicated region
  $region38: #{gcn_forward.1} parent=0 // pred_check
    _
  $region39: #{gcn_forward.1} parent=0 // pred_check_branch
    %38 = sbr.rel (0) target = $region41
  $region40: #{gcn_forward.1} parent=0 // pred_region
    _
  $region41: #{gcn_forward.1} parent=0 // pred_fallthru
    _
  // Predicated region
  $region42: #{gcn_forward.1} parent=0 // pred_check
    _
  $region43: #{gcn_forward.1} parent=0 // pred_check_branch
    %40 = sbr.rel (0) target = $region45
  $region44: #{gcn_forward.1} parent=0 // pred_region
    _
  $region45: #{gcn_forward.1} parent=0 // pred_fallthru
    _
  // Predicated region
  $region46: #{gcn_forward.1} parent=0 // pred_check
    _
  $region47: #{gcn_forward.1} parent=0 // pred_check_branch
    %42 = sbr.rel (0) target = $region49
  $region48: #{gcn_forward.1} parent=0 // pred_region
    _
  $region49: #{gcn_forward.1} parent=0 // pred_fallthru
    _
  // Predicated region
  $region50: #{gcn_forward.1} parent=0 // pred_check
    _
  $region51: #{gcn_forward.1} parent=0 // pred_check_branch
    %44 = sbr.rel (0) target = $region53
  $region52: #{gcn_forward.1} parent=0 // pred_region
    _
  $region53: #{gcn_forward.1} parent=0 // pred_fallthru
    _
  // Predicated region
  $region54: #{gcn_forward.1} parent=0 // pred_check
    _
  $region55: #{gcn_forward.1} parent=0 // pred_check_branch
    %46 = sbr.rel (0) target = $region57
  $region56: #{gcn_forward.1} parent=0 // pred_region
    _
  $region57: #{gcn_forward.1} parent=0 // pred_fallthru
    _
  %v48 = vld [vmem:[%s1] sm:$0xf]
  %v49 = vld [vmem:[%s1 + $0x4] sm:$0xf]
  %v50 = vld [vmem:[%s1 + $0x8] sm:$0xf]
  %v51 = vld [vmem:[%s1 + $0xc] sm:$0xf]
  %v52 = vld [vmem:[%s1 + $0x10] sm:$0xf]
  %v53 = vld [vmem:[%s1 + $0x14] sm:$0xf]
  %v54 = vld [vmem:[%s1 + $0x18] sm:$0xf]
  %v55 = vld [vmem:[%s1 + $0x1c] sm:$0xf]
  %v56 = vld [vmem:[%s0] sm:$0xf]
  %v57 = vld [vmem:[%s0 + $0x4] sm:$0xf]
  %v58 = vld [vmem:[%s0 + $0x8] sm:$0xf]
  %v59 = vld [vmem:[%s0 + $0xc] sm:$0xf]
  %v60 = vld [vmem:[%s0 + $0x10] sm:$0xf]
  %v61 = vld [vmem:[%s0 + $0x14] sm:$0xf]
  %v62 = vld [vmem:[%s0 + $0x18] sm:$0xf]
  %v63 = vld [vmem:[%s0 + $0x1c] sm:$0xf]
  %v64 = vld [vmem:[%s2] sm:$0xf]
  %v65 = vld [vmem:[%s2 + $0x4] sm:$0xf]
  %v66 = vld [vmem:[%s2 + $0x8] sm:$0xf]
  %v67 = vld [vmem:[%s2 + $0xc] sm:$0xf]
  %v68 = vld [vmem:[%s2 + $0x10] sm:$0xf]
  %v69 = vld [vmem:[%s2 + $0x14] sm:$0xf]
  %v70 = vld [vmem:[%s2 + $0x18] sm:$0xf]
  %v71 = vld [vmem:[%s2 + $0x1c] sm:$0xf]
  %v72 = vld [vmem:[%s2 + $0x20] sm:$0xf]
  %v73 = vld [vmem:[%s2 + $0x24] sm:$0xf]
  %v74 = vld [vmem:[%s2 + $0x28] sm:$0xf]
  %v75 = vld [vmem:[%s2 + $0x2c] sm:$0xf]
  %v76 = vld [vmem:[%s2 + $0x30] sm:$0xf]
  %v77 = vld [vmem:[%s2 + $0x34] sm:$0xf]
  %v78 = vld [vmem:[%s2 + $0x38] sm:$0xf]
  %v79 = vld [vmem:[%s2 + $0x3c] sm:$0xf]
  %v80 = vld [vmem:[%s3] sm:$0x1]
  %v82 = vlaneseq
  %v83 = vshrl.u32 %v82, 7
  %v84 = vsub.s32 0, %v83
  %v85 = vrot.slane %v80, %v84
  %v95 = vunpack.c.l.b16 %v56
  %v96 = vunpack.c.l.b16 %v57
  %v97 = vunpack.c.l.b16 %v58
  %v98 = vunpack.c.l.b16 %v59
  %v99 = vunpack.c.l.b16 %v60
  %v100 = vunpack.c.l.b16 %v61
  %v101 = vunpack.c.l.b16 %v62
  %v102 = vunpack.c.l.b16 %v63
  %v103 = vpack.c.b16 %v96, %v95
  %v104 = vpack.c.b16 %v98, %v97
  %v105 = vpack.c.b16 %v100, %v99
  %v106 = vpack.c.b16 %v102, %v101
  %v127 = vunpack.c.l.b16 %v64
  %v128 = vunpack.c.l.b16 %v65
  %v129 = vunpack.c.l.b16 %v66
  %v130 = vunpack.c.l.b16 %v67
  %v131 = vunpack.c.l.b16 %v68
  %v132 = vunpack.c.l.b16 %v69
  %v133 = vunpack.c.l.b16 %v70
  %v134 = vunpack.c.l.b16 %v71
  %v135 = vunpack.c.l.b16 %v72
  %v136 = vunpack.c.l.b16 %v73
  %v137 = vunpack.c.l.b16 %v74
  %v138 = vunpack.c.l.b16 %v75
  %v139 = vunpack.c.l.b16 %v76
  %v140 = vunpack.c.l.b16 %v77
  %v141 = vunpack.c.l.b16 %v78
  %v142 = vunpack.c.l.b16 %v79
  %v143 = vpack.c.b16 %v128, %v127
  %v144 = vpack.c.b16 %v130, %v129
  %v145 = vpack.c.b16 %v132, %v131
  %v146 = vpack.c.b16 %v134, %v133
  %v147 = vpack.c.b16 %v136, %v135
  %v148 = vpack.c.b16 %v138, %v137
  %v149 = vpack.c.b16 %v140, %v139
  %v150 = vpack.c.b16 %v142, %v141
  %159 = vmatprep.subr.bf16.mxu0 0
  %160 = vmatpush1.bf16.msra.mxu0 %v143
  %161 = vmatprep.subr.bf16.mxu0 0
  %162 = vmatpush1.bf16.msra.mxu0 %v144
  %163 = vmatprep.subr.bf16.mxu0 0
  %164 = vmatpush1.bf16.msra.mxu0 %v145
  %165 = vmatprep.subr.bf16.mxu0 0
  %166 = vmatpush1.bf16.msra.mxu0 %v146
  %167 = vmatprep.subr.bf16.mxu0 0
  %168 = vmatpush1.bf16.msra.mxu0 %v147
  %169 = vmatprep.subr.bf16.mxu0 0
  %170 = vmatpush1.bf16.msra.mxu0 %v148
  %171 = vmatprep.subr.bf16.mxu0 0
  %172 = vmatpush1.bf16.msra.mxu0 %v149
  %173 = vmatprep.subr.bf16.mxu0 0
  %174 = vmatpush1.bf16.msra.mxu0 %v150
  %175 = vmatprep.subr.bf16.mxu0 0
  %176 = vmatpush1.bf16.msra.mxu0 0
  %177 = vmatprep.subr.bf16.mxu0 0
  %178 = vmatpush1.bf16.msra.mxu0 0
  %179 = vmatprep.subr.bf16.mxu0 0
  %180 = vmatpush1.bf16.msra.mxu0 0
  %181 = vmatprep.subr.bf16.mxu0 0
  %182 = vmatpush1.bf16.msra.mxu0 0
  %183 = vmatprep.subr.bf16.mxu0 0
  %184 = vmatpush1.bf16.msra.mxu0 0
  %185 = vmatprep.subr.bf16.mxu0 0
  %186 = vmatpush1.bf16.msra.mxu0 0
  %187 = vmatprep.subr.bf16.mxu0 0
  %188 = vmatpush1.bf16.msra.mxu0 0
  %189 = vmatprep.subr.bf16.mxu0 0
  %190 = vmatpush1.bf16.msra.mxu0 0
  %191 = vmatprep.mubr.bf16.mxu0 0
  %192 = vmatmul.mubr.bf16.gmra.mrb[0].mxu0 %v103
  %v193 = vpop.f32.mrb[0].mxu0
  %v194 = vadd.f32 %v85, %v193
  %v195 = vpop.f32.mrb[0].mxu0
  %v196 = vpop.f32.mrb[0].mxu0
  %v197 = vadd.f32 %v85, %v196
  %v198 = vpop.f32.mrb[0].mxu0
  %199 = vmatprep.mubr.bf16.mxu0 0
  %200 = vmatmul.mubr.bf16.gmra.mrb[0].mxu0 %v104
  %v201 = vpop.f32.mrb[0].mxu0
  %v202 = vadd.f32 %v85, %v201
  %v203 = vpop.f32.mrb[0].mxu0
  %v204 = vpop.f32.mrb[0].mxu0
  %v205 = vadd.f32 %v85, %v204
  %v206 = vpop.f32.mrb[0].mxu0
  %207 = vmatprep.mubr.bf16.mxu0 0
  %208 = vmatmul.mubr.bf16.gmra.mrb[0].mxu0 %v105
  %v209 = vpop.f32.mrb[0].mxu0
  %v210 = vadd.f32 %v85, %v209
  %v211 = vpop.f32.mrb[0].mxu0
  %v212 = vpop.f32.mrb[0].mxu0
  %v213 = vadd.f32 %v85, %v212
  %v214 = vpop.f32.mrb[0].mxu0
  %215 = vmatprep.mubr.bf16.mxu0 0
  %216 = vmatmul.mubr.bf16.gmra.mrb[0].mxu0 %v106
  %v217 = vpop.f32.mrb[0].mxu0
  %v218 = vadd.f32 %v85, %v217
  %v219 = vpop.f32.mrb[0].mxu0
  %v220 = vpop.f32.mrb[0].mxu0
  %v221 = vadd.f32 %v85, %v220
  %v222 = vpop.f32.mrb[0].mxu0
  %223 = vdwg.mxu0
  %v224 = vpack.c.bf16 %v197, %v194
  %v225 = vpack.c.bf16 %v205, %v202
  %v226 = vpack.c.bf16 %v213, %v210
  %v227 = vpack.c.bf16 %v221, %v218
  %v236 = vunpack.c.l.b16 %v48
  %v237 = vunpack.c.l.b16 %v49
  %v238 = vunpack.c.l.b16 %v50
  %v239 = vunpack.c.l.b16 %v51
  %v240 = vunpack.c.l.b16 %v52
  %v241 = vunpack.c.l.b16 %v53
  %v242 = vunpack.c.l.b16 %v54
  %v243 = vunpack.c.l.b16 %v55
  %v244 = vpack.c.b16 %v237, %v236
  %v245 = vpack.c.b16 %v239, %v238
  %v246 = vpack.c.b16 %v241, %v240
  %v247 = vpack.c.b16 %v243, %v242
  %vm248 = vcmask 523264
  %v250 = vsel %vm248, %v244, 0
  %v253 = vsel %vm248, %v245, 0
  %v256 = vsel %vm248, %v246, 0
  %v259 = vsel %vm248, %v247, 0
  %261 = vmatprep.subr.bf16.mxu0 0
  %262 = vmatpush1.bf16.msra.mxu0 %v224
  %263 = vmatprep.subr.bf16.mxu0 0
  %264 = vmatpush1.bf16.msra.mxu0 %v225
  %265 = vmatprep.subr.bf16.mxu0 0
  %266 = vmatpush1.bf16.msra.mxu0 %v226
  %267 = vmatprep.subr.bf16.mxu0 0
  %268 = vmatpush1.bf16.msra.mxu0 %v227
  %269 = vmatprep.subr.bf16.mxu0 0
  %270 = vmatpush1.bf16.msra.mxu0 0
  %271 = vmatprep.subr.bf16.mxu0 0
  %272 = vmatpush1.bf16.msra.mxu0 0
  %273 = vmatprep.subr.bf16.mxu0 0
  %274 = vmatpush1.bf16.msra.mxu0 0
  %275 = vmatprep.subr.bf16.mxu0 0
  %276 = vmatpush1.bf16.msra.mxu0 0
  %277 = vmatprep.subr.bf16.mxu0 0
  %278 = vmatpush1.bf16.msra.mxu0 0
  %279 = vmatprep.subr.bf16.mxu0 0
  %280 = vmatpush1.bf16.msra.mxu0 0
  %281 = vmatprep.subr.bf16.mxu0 0
  %282 = vmatpush1.bf16.msra.mxu0 0
  %283 = vmatprep.subr.bf16.mxu0 0
  %284 = vmatpush1.bf16.msra.mxu0 0
  %285 = vmatprep.subr.bf16.mxu0 0
  %286 = vmatpush1.bf16.msra.mxu0 0
  %287 = vmatprep.subr.bf16.mxu0 0
  %288 = vmatpush1.bf16.msra.mxu0 0
  %289 = vmatprep.subr.bf16.mxu0 0
  %290 = vmatpush1.bf16.msra.mxu0 0
  %291 = vmatprep.subr.bf16.mxu0 0
  %292 = vmatpush1.bf16.msra.mxu0 0
  %293 = vmatprep.mubr.bf16.mxu0 0
  %294 = vmatmul.mubr.bf16.gmra.mrb[0].mxu0 %v250
  %v295 = vpop.f32.mrb[0].mxu0
  %v296 = vadd.f32 0.0, %v295
  %v297 = vpop.f32.mrb[0].mxu0
  %v298 = vpop.f32.mrb[0].mxu0
  %v299 = vadd.f32 0.0, %v298
  %v300 = vpop.f32.mrb[0].mxu0
  %301 = vmatprep.mubr.bf16.mxu0 0
  %302 = vmatmul.mubr.bf16.gmra.mrb[0].mxu0 %v253
  %v303 = vpop.f32.mrb[0].mxu0
  %v304 = vadd.f32 0.0, %v303
  %v305 = vpop.f32.mrb[0].mxu0
  %v306 = vpop.f32.mrb[0].mxu0
  %v307 = vadd.f32 0.0, %v306
  %v308 = vpop.f32.mrb[0].mxu0
  %309 = vmatprep.mubr.bf16.mxu0 0
  %310 = vmatmul.mubr.bf16.gmra.mrb[0].mxu0 %v256
  %v311 = vpop.f32.mrb[0].mxu0
  %v312 = vadd.f32 0.0, %v311
  %v313 = vpop.f32.mrb[0].mxu0
  %v314 = vpop.f32.mrb[0].mxu0
  %v315 = vadd.f32 0.0, %v314
  %v316 = vpop.f32.mrb[0].mxu0
  %317 = vmatprep.mubr.bf16.mxu0 0
  %318 = vmatmul.mubr.bf16.gmra.mrb[0].mxu0 %v259
  %v319 = vpop.f32.mrb[0].mxu0
  %v320 = vadd.f32 0.0, %v319
  %v321 = vpop.f32.mrb[0].mxu0
  %v322 = vpop.f32.mrb[0].mxu0
  %v323 = vadd.f32 0.0, %v322
  %v324 = vpop.f32.mrb[0].mxu0
  %325 = vdwg.mxu0
  %v326 = vmax.f32 %v296, 0.0
  %v327 = vmax.f32 %v299, 0.0
  %v328 = vmax.f32 %v304, 0.0
  %v329 = vmax.f32 %v307, 0.0
  %v330 = vmax.f32 %v312, 0.0
  %v331 = vmax.f32 %v315, 0.0
  %v332 = vmax.f32 %v320, 0.0
  %v333 = vmax.f32 %v323, 0.0
  %334 = vst [vmem:[#allocation2] sm:$0xff] %v326
  %335 = vst [vmem:[#allocation2 + $0x8] sm:$0xff] %v327
  %336 = vst [vmem:[#allocation2 + $0x10] sm:$0xff] %v328
  %337 = vst [vmem:[#allocation2 + $0x18] sm:$0xff] %v329
  %338 = vst [vmem:[#allocation2 + $0x20] sm:$0xff] %v330
  %339 = vst [vmem:[#allocation2 + $0x28] sm:$0xff] %v331
  %340 = vst [vmem:[#allocation2 + $0x30] sm:$0xff] %v332
  %341 = vst [vmem:[#allocation2 + $0x38] sm:$0xff] %v333
  %v342 = vld [vmem:[#allocation2] sm:$0xff]
  %v343 = vld [vmem:[#allocation2 + $0x8] sm:$0xff]
  %v344 = vld [vmem:[#allocation2 + $0x10] sm:$0xff]
  %v345 = vld [vmem:[#allocation2 + $0x18] sm:$0xff]
  %v346 = vld [vmem:[#allocation2 + $0x20] sm:$0xff]
  %v347 = vld [vmem:[#allocation2 + $0x28] sm:$0xff]
  %v348 = vld [vmem:[#allocation2 + $0x30] sm:$0xff]
  %v349 = vld [vmem:[#allocation2 + $0x38] sm:$0xff]
  %v350 = vpack.c.bf16 %v343, %v342
  %v351 = vpack.c.bf16 %v345, %v344
  %v352 = vpack.c.bf16 %v347, %v346
  %v353 = vpack.c.bf16 %v349, %v348
  %v354 = vld [vmem:[%s4] sm:$0xf]
  %v355 = vld [vmem:[%s4 + $0x4] sm:$0xf]
  %v356 = vld [vmem:[%s4 + $0x8] sm:$0xf]
  %v357 = vld [vmem:[%s4 + $0xc] sm:$0xf]
  %v358 = vld [vmem:[%s4 + $0x10] sm:$0xf]
  %v359 = vld [vmem:[%s4 + $0x14] sm:$0xf]
  %v360 = vld [vmem:[%s4 + $0x18] sm:$0xf]
  %v361 = vld [vmem:[%s4 + $0x1c] sm:$0xf]
  %v362 = vld [vmem:[%s4 + $0x20] sm:$0xf]
  %v363 = vld [vmem:[%s4 + $0x24] sm:$0xf]
  %v364 = vld [vmem:[%s4 + $0x28] sm:$0xf]
  %v365 = vld [vmem:[%s4 + $0x2c] sm:$0xf]
  %v366 = vld [vmem:[%s4 + $0x30] sm:$0xf]
  %v367 = vld [vmem:[%s4 + $0x34] sm:$0xf]
  %v368 = vld [vmem:[%s4 + $0x38] sm:$0xf]
  %v369 = vld [vmem:[%s4 + $0x3c] sm:$0xf]
  %v370 = vld [vmem:[%s5] sm:$0x1]
  %v372 = vlaneseq
  %v373 = vshrl.u32 %v372, 7
  %v374 = vsub.s32 0, %v373
  %v375 = vrot.slane %v370, %v374
  %v393 = vunpack.c.l.b16 %v354
  %v394 = vunpack.c.l.b16 %v355
  %v395 = vunpack.c.l.b16 %v356
  %v396 = vunpack.c.l.b16 %v357
  %v397 = vunpack.c.l.b16 %v358
  %v398 = vunpack.c.l.b16 %v359
  %v399 = vunpack.c.l.b16 %v360
  %v400 = vunpack.c.l.b16 %v361
  %v401 = vunpack.c.l.b16 %v362
  %v402 = vunpack.c.l.b16 %v363
  %v403 = vunpack.c.l.b16 %v364
  %v404 = vunpack.c.l.b16 %v365
  %v405 = vunpack.c.l.b16 %v366
  %v406 = vunpack.c.l.b16 %v367
  %v407 = vunpack.c.l.b16 %v368
  %v408 = vunpack.c.l.b16 %v369
  %v409 = vpack.c.b16 %v394, %v393
  %v410 = vpack.c.b16 %v396, %v395
  %v411 = vpack.c.b16 %v398, %v397
  %v412 = vpack.c.b16 %v400, %v399
  %v413 = vpack.c.b16 %v402, %v401
  %v414 = vpack.c.b16 %v404, %v403
  %v415 = vpack.c.b16 %v406, %v405
  %v416 = vpack.c.b16 %v408, %v407
  %425 = vmatprep.subr.bf16.mxu0 0
  %426 = vmatpush1.bf16.msra.mxu0 %v409
  %427 = vmatprep.subr.bf16.mxu0 0
  %428 = vmatpush1.bf16.msra.mxu0 %v410
  %429 = vmatprep.subr.bf16.mxu0 0
  %430 = vmatpush1.bf16.msra.mxu0 %v411
  %431 = vmatprep.subr.bf16.mxu0 0
  %432 = vmatpush1.bf16.msra.mxu0 %v412
  %433 = vmatprep.subr.bf16.mxu0 0
  %434 = vmatpush1.bf16.msra.mxu0 %v413
  %435 = vmatprep.subr.bf16.mxu0 0
  %436 = vmatpush1.bf16.msra.mxu0 %v414
  %437 = vmatprep.subr.bf16.mxu0 0
  %438 = vmatpush1.bf16.msra.mxu0 %v415
  %439 = vmatprep.subr.bf16.mxu0 0
  %440 = vmatpush1.bf16.msra.mxu0 %v416
  %441 = vmatprep.subr.bf16.mxu0 0
  %442 = vmatpush1.bf16.msra.mxu0 0
  %443 = vmatprep.subr.bf16.mxu0 0
  %444 = vmatpush1.bf16.msra.mxu0 0
  %445 = vmatprep.subr.bf16.mxu0 0
  %446 = vmatpush1.bf16.msra.mxu0 0
  %447 = vmatprep.subr.bf16.mxu0 0
  %448 = vmatpush1.bf16.msra.mxu0 0
  %449 = vmatprep.subr.bf16.mxu0 0
  %450 = vmatpush1.bf16.msra.mxu0 0
  %451 = vmatprep.subr.bf16.mxu0 0
  %452 = vmatpush1.bf16.msra.mxu0 0
  %453 = vmatprep.subr.bf16.mxu0 0
  %454 = vmatpush1.bf16.msra.mxu0 0
  %455 = vmatprep.subr.bf16.mxu0 0
  %456 = vmatpush1.bf16.msra.mxu0 0
  %457 = vmatprep.mubr.bf16.mxu0 0
  %458 = vmatmul.mubr.bf16.gmra.mrb[0].mxu0 %v350
  %v459 = vpop.f32.mrb[0].mxu0
  %v460 = vadd.f32 %v375, %v459
  %v461 = vpop.f32.mrb[0].mxu0
  %v462 = vpop.f32.mrb[0].mxu0
  %v463 = vadd.f32 %v375, %v462
  %v464 = vpop.f32.mrb[0].mxu0
  %465 = vmatprep.mubr.bf16.mxu0 0
  %466 = vmatmul.mubr.bf16.gmra.mrb[0].mxu0 %v351
  %v467 = vpop.f32.mrb[0].mxu0
  %v468 = vadd.f32 %v375, %v467
  %v469 = vpop.f32.mrb[0].mxu0
  %v470 = vpop.f32.mrb[0].mxu0
  %v471 = vadd.f32 %v375, %v470
  %v472 = vpop.f32.mrb[0].mxu0
  %473 = vmatprep.mubr.bf16.mxu0 0
  %474 = vmatmul.mubr.bf16.gmra.mrb[0].mxu0 %v352
  %v475 = vpop.f32.mrb[0].mxu0
  %v476 = vadd.f32 %v375, %v475
  %v477 = vpop.f32.mrb[0].mxu0
  %v478 = vpop.f32.mrb[0].mxu0
  %v479 = vadd.f32 %v375, %v478
  %v480 = vpop.f32.mrb[0].mxu0
  %481 = vmatprep.mubr.bf16.mxu0 0
  %482 = vmatmul.mubr.bf16.gmra.mrb[0].mxu0 %v353
  %v483 = vpop.f32.mrb[0].mxu0
  %v484 = vadd.f32 %v375, %v483
  %v485 = vpop.f32.mrb[0].mxu0
  %v486 = vpop.f32.mrb[0].mxu0
  %v487 = vadd.f32 %v375, %v486
  %v488 = vpop.f32.mrb[0].mxu0
  %489 = vdwg.mxu0
  %v490 = vpack.c.bf16 %v463, %v460
  %v491 = vpack.c.bf16 %v471, %v468
  %v492 = vpack.c.bf16 %v479, %v476
  %v493 = vpack.c.bf16 %v487, %v484
  %494 = vmatprep.subr.bf16.mxu0 0
  %495 = vmatpush1.bf16.msra.mxu0 %v490
  %496 = vmatprep.subr.bf16.mxu0 0
  %497 = vmatpush1.bf16.msra.mxu0 %v491
  %498 = vmatprep.subr.bf16.mxu0 0
  %499 = vmatpush1.bf16.msra.mxu0 %v492
  %500 = vmatprep.subr.bf16.mxu0 0
  %501 = vmatpush1.bf16.msra.mxu0 %v493
  %502 = vmatprep.subr.bf16.mxu0 0
  %503 = vmatpush1.bf16.msra.mxu0 0
  %504 = vmatprep.subr.bf16.mxu0 0
  %505 = vmatpush1.bf16.msra.mxu0 0
  %506 = vmatprep.subr.bf16.mxu0 0
  %507 = vmatpush1.bf16.msra.mxu0 0
  %508 = vmatprep.subr.bf16.mxu0 0
  %509 = vmatpush1.bf16.msra.mxu0 0
  %510 = vmatprep.subr.bf16.mxu0 0
  %511 = vmatpush1.bf16.msra.mxu0 0
  %512 = vmatprep.subr.bf16.mxu0 0
  %513 = vmatpush1.bf16.msra.mxu0 0
  %514 = vmatprep.subr.bf16.mxu0 0
  %515 = vmatpush1.bf16.msra.mxu0 0
  %516 = vmatprep.subr.bf16.mxu0 0
  %517 = vmatpush1.bf16.msra.mxu0 0
  %518 = vmatprep.subr.bf16.mxu0 0
  %519 = vmatpush1.bf16.msra.mxu0 0
  %520 = vmatprep.subr.bf16.mxu0 0
  %521 = vmatpush1.bf16.msra.mxu0 0
  %522 = vmatprep.subr.bf16.mxu0 0
  %523 = vmatpush1.bf16.msra.mxu0 0
  %524 = vmatprep.subr.bf16.mxu0 0
  %525 = vmatpush1.bf16.msra.mxu0 0
  %526 = vmatprep.mubr.bf16.mxu0 0
  %527 = vmatmul.mubr.bf16.gmra.mrb[0].mxu0 %v250
  %v528 = vpop.f32.mrb[0].mxu0
  %v529 = vadd.f32 0.0, %v528
  %v530 = vpop.f32.mrb[0].mxu0
  %v531 = vpop.f32.mrb[0].mxu0
  %v532 = vadd.f32 0.0, %v531
  %v533 = vpop.f32.mrb[0].mxu0
  %534 = vmatprep.mubr.bf16.mxu0 0
  %535 = vmatmul.mubr.bf16.gmra.mrb[0].mxu0 %v253
  %v536 = vpop.f32.mrb[0].mxu0
  %v537 = vadd.f32 0.0, %v536
  %v538 = vpop.f32.mrb[0].mxu0
  %v539 = vpop.f32.mrb[0].mxu0
  %v540 = vadd.f32 0.0, %v539
  %v541 = vpop.f32.mrb[0].mxu0
  %542 = vmatprep.mubr.bf16.mxu0 0
  %543 = vmatmul.mubr.bf16.gmra.mrb[0].mxu0 %v256
  %v544 = vpop.f32.mrb[0].mxu0
  %v545 = vadd.f32 0.0, %v544
  %v546 = vpop.f32.mrb[0].mxu0
  %v547 = vpop.f32.mrb[0].mxu0
  %v548 = vadd.f32 0.0, %v547
  %v549 = vpop.f32.mrb[0].mxu0
  %550 = vmatprep.mubr.bf16.mxu0 0
  %551 = vmatmul.mubr.bf16.gmra.mrb[0].mxu0 %v259
  %v552 = vpop.f32.mrb[0].mxu0
  %v553 = vadd.f32 0.0, %v552
  %v554 = vpop.f32.mrb[0].mxu0
  %v555 = vpop.f32.mrb[0].mxu0
  %v556 = vadd.f32 0.0, %v555
  %v557 = vpop.f32.mrb[0].mxu0
  %558 = vdwg.mxu0
  %v559 = vmax.f32 %v529, 0.0
  %v560 = vmax.f32 %v532, 0.0
  %v561 = vmax.f32 %v537, 0.0
  %v562 = vmax.f32 %v540, 0.0
  %v563 = vmax.f32 %v545, 0.0
  %v564 = vmax.f32 %v548, 0.0
  %v565 = vmax.f32 %v553, 0.0
  %v566 = vmax.f32 %v556, 0.0
  %567 = vst [vmem:[#allocation3] sm:$0xff] %v559
  %568 = vst [vmem:[#allocation3 + $0x8] sm:$0xff] %v560
  %569 = vst [vmem:[#allocation3 + $0x10] sm:$0xff] %v561
  %570 = vst [vmem:[#allocation3 + $0x18] sm:$0xff] %v562
  %571 = vst [vmem:[#allocation3 + $0x20] sm:$0xff] %v563
  %572 = vst [vmem:[#allocation3 + $0x28] sm:$0xff] %v564
  %573 = vst [vmem:[#allocation3 + $0x30] sm:$0xff] %v565
  %574 = vst [vmem:[#allocation3 + $0x38] sm:$0xff] %v566
  %v575 = vld [vmem:[#allocation3] sm:$0xff]
  %v576 = vld [vmem:[#allocation3 + $0x8] sm:$0xff]
  %v577 = vld [vmem:[#allocation3 + $0x10] sm:$0xff]
  %v578 = vld [vmem:[#allocation3 + $0x18] sm:$0xff]
  %v579 = vld [vmem:[#allocation3 + $0x20] sm:$0xff]
  %v580 = vld [vmem:[#allocation3 + $0x28] sm:$0xff]
  %v581 = vld [vmem:[#allocation3 + $0x30] sm:$0xff]
  %v582 = vld [vmem:[#allocation3 + $0x38] sm:$0xff]
  %v583 = vpack.c.bf16 %v576, %v575
  %v584 = vpack.c.bf16 %v578, %v577
  %v585 = vpack.c.bf16 %v580, %v579
  %v586 = vpack.c.bf16 %v582, %v581
  %v587 = vld [vmem:[%s6] sm:$0xf]
  %v588 = vld [vmem:[%s6 + $0x4] sm:$0xf]
  %v589 = vld [vmem:[%s6 + $0x8] sm:$0xf]
  %v590 = vld [vmem:[%s6 + $0xc] sm:$0xf]
  %v591 = vld [vmem:[%s6 + $0x10] sm:$0xf]
  %v592 = vld [vmem:[%s6 + $0x14] sm:$0xf]
  %v593 = vld [vmem:[%s6 + $0x18] sm:$0xf]
  %v594 = vld [vmem:[%s6 + $0x1c] sm:$0xf]
  %v595 = vld [vmem:[%s6 + $0x20] sm:$0xf]
  %v596 = vld [vmem:[%s6 + $0x24] sm:$0xf]
  %v597 = vld [vmem:[%s6 + $0x28] sm:$0xf]
  %v598 = vld [vmem:[%s6 + $0x2c] sm:$0xf]
  %v599 = vld [vmem:[%s6 + $0x30] sm:$0xf]
  %v600 = vld [vmem:[%s6 + $0x34] sm:$0xf]
  %v601 = vld [vmem:[%s6 + $0x38] sm:$0xf]
  %v602 = vld [vmem:[%s6 + $0x3c] sm:$0xf]
  %v603 = vld [vmem:[%s7] sm:$0x1]
  %v605 = vlaneseq
  %v606 = vshrl.u32 %v605, 7
  %v607 = vsub.s32 0, %v606
  %v608 = vrot.slane %v603, %v607
  %v626 = vunpack.c.l.b16 %v587
  %v627 = vunpack.c.l.b16 %v588
  %v628 = vunpack.c.l.b16 %v589
  %v629 = vunpack.c.l.b16 %v590
  %v630 = vunpack.c.l.b16 %v591
  %v631 = vunpack.c.l.b16 %v592
  %v632 = vunpack.c.l.b16 %v593
  %v633 = vunpack.c.l.b16 %v594
  %v634 = vunpack.c.l.b16 %v595
  %v635 = vunpack.c.l.b16 %v596
  %v636 = vunpack.c.l.b16 %v597
  %v637 = vunpack.c.l.b16 %v598
  %v638 = vunpack.c.l.b16 %v599
  %v639 = vunpack.c.l.b16 %v600
  %v640 = vunpack.c.l.b16 %v601
  %v641 = vunpack.c.l.b16 %v602
  %v642 = vpack.c.b16 %v627, %v626
  %v643 = vpack.c.b16 %v629, %v628
  %v644 = vpack.c.b16 %v631, %v630
  %v645 = vpack.c.b16 %v633, %v632
  %v646 = vpack.c.b16 %v635, %v634
  %v647 = vpack.c.b16 %v637, %v636
  %v648 = vpack.c.b16 %v639, %v638
  %v649 = vpack.c.b16 %v641, %v640
  %658 = vmatprep.subr.bf16.mxu0 0
  %659 = vmatpush1.bf16.msra.mxu0 %v642
  %660 = vmatprep.subr.bf16.mxu0 0
  %661 = vmatpush1.bf16.msra.mxu0 %v643
  %662 = vmatprep.subr.bf16.mxu0 0
  %663 = vmatpush1.bf16.msra.mxu0 %v644
  %664 = vmatprep.subr.bf16.mxu0 0
  %665 = vmatpush1.bf16.msra.mxu0 %v645
  %666 = vmatprep.subr.bf16.mxu0 0
  %667 = vmatpush1.bf16.msra.mxu0 %v646
  %668 = vmatprep.subr.bf16.mxu0 0
  %669 = vmatpush1.bf16.msra.mxu0 %v647
  %670 = vmatprep.subr.bf16.mxu0 0
  %671 = vmatpush1.bf16.msra.mxu0 %v648
  %672 = vmatprep.subr.bf16.mxu0 0
  %673 = vmatpush1.bf16.msra.mxu0 %v649
  %674 = vmatprep.subr.bf16.mxu0 0
  %675 = vmatpush1.bf16.msra.mxu0 0
  %676 = vmatprep.subr.bf16.mxu0 0
  %677 = vmatpush1.bf16.msra.mxu0 0
  %678 = vmatprep.subr.bf16.mxu0 0
  %679 = vmatpush1.bf16.msra.mxu0 0
  %680 = vmatprep.subr.bf16.mxu0 0
  %681 = vmatpush1.bf16.msra.mxu0 0
  %682 = vmatprep.subr.bf16.mxu0 0
  %683 = vmatpush1.bf16.msra.mxu0 0
  %684 = vmatprep.subr.bf16.mxu0 0
  %685 = vmatpush1.bf16.msra.mxu0 0
  %686 = vmatprep.subr.bf16.mxu0 0
  %687 = vmatpush1.bf16.msra.mxu0 0
  %688 = vmatprep.subr.bf16.mxu0 0
  %689 = vmatpush1.bf16.msra.mxu0 0
  %690 = vmatprep.mubr.bf16.mxu0 0
  %691 = vmatmul.mubr.bf16.gmra.mrb[0].mxu0 %v583
  %v692 = vpop.f32.mrb[0].mxu0
  %v693 = vadd.f32 %v608, %v692
  %v694 = vpop.f32.mrb[0].mxu0
  %v695 = vpop.f32.mrb[0].mxu0
  %v696 = vadd.f32 %v608, %v695
  %v697 = vpop.f32.mrb[0].mxu0
  %698 = vmatprep.mubr.bf16.mxu0 0
  %699 = vmatmul.mubr.bf16.gmra.mrb[0].mxu0 %v584
  %v700 = vpop.f32.mrb[0].mxu0
  %v701 = vadd.f32 %v608, %v700
  %v702 = vpop.f32.mrb[0].mxu0
  %v703 = vpop.f32.mrb[0].mxu0
  %v704 = vadd.f32 %v608, %v703
  %v705 = vpop.f32.mrb[0].mxu0
  %706 = vmatprep.mubr.bf16.mxu0 0
  %707 = vmatmul.mubr.bf16.gmra.mrb[0].mxu0 %v585
  %v708 = vpop.f32.mrb[0].mxu0
  %v709 = vadd.f32 %v608, %v708
  %v710 = vpop.f32.mrb[0].mxu0
  %v711 = vpop.f32.mrb[0].mxu0
  %v712 = vadd.f32 %v608, %v711
  %v713 = vpop.f32.mrb[0].mxu0
  %714 = vmatprep.mubr.bf16.mxu0 0
  %715 = vmatmul.mubr.bf16.gmra.mrb[0].mxu0 %v586
  %v716 = vpop.f32.mrb[0].mxu0
  %v717 = vadd.f32 %v608, %v716
  %v718 = vpop.f32.mrb[0].mxu0
  %v719 = vpop.f32.mrb[0].mxu0
  %v720 = vadd.f32 %v608, %v719
  %v721 = vpop.f32.mrb[0].mxu0
  %722 = vdwg.mxu0
  %v723 = vpack.c.bf16 %v696, %v693
  %v724 = vpack.c.bf16 %v704, %v701
  %v725 = vpack.c.bf16 %v712, %v709
  %v726 = vpack.c.bf16 %v720, %v717
  %727 = vmatprep.subr.bf16.mxu0 0
  %728 = vmatpush1.bf16.msra.mxu0 %v723
  %729 = vmatprep.subr.bf16.mxu0 0
  %730 = vmatpush1.bf16.msra.mxu0 %v724
  %731 = vmatprep.subr.bf16.mxu0 0
  %732 = vmatpush1.bf16.msra.mxu0 %v725
  %733 = vmatprep.subr.bf16.mxu0 0
  %734 = vmatpush1.bf16.msra.mxu0 %v726
  %735 = vmatprep.subr.bf16.mxu0 0
  %736 = vmatpush1.bf16.msra.mxu0 0
  %737 = vmatprep.subr.bf16.mxu0 0
  %738 = vmatpush1.bf16.msra.mxu0 0
  %739 = vmatprep.subr.bf16.mxu0 0
  %740 = vmatpush1.bf16.msra.mxu0 0
  %741 = vmatprep.subr.bf16.mxu0 0
  %742 = vmatpush1.bf16.msra.mxu0 0
  %743 = vmatprep.subr.bf16.mxu0 0
  %744 = vmatpush1.bf16.msra.mxu0 0
  %745 = vmatprep.subr.bf16.mxu0 0
  %746 = vmatpush1.bf16.msra.mxu0 0
  %747 = vmatprep.subr.bf16.mxu0 0
  %748 = vmatpush1.bf16.msra.mxu0 0
  %749 = vmatprep.subr.bf16.mxu0 0
  %750 = vmatpush1.bf16.msra.mxu0 0
  %751 = vmatprep.subr.bf16.mxu0 0
  %752 = vmatpush1.bf16.msra.mxu0 0
  %753 = vmatprep.subr.bf16.mxu0 0
  %754 = vmatpush1.bf16.msra.mxu0 0
  %755 = vmatprep.subr.bf16.mxu0 0
  %756 = vmatpush1.bf16.msra.mxu0 0
  %757 = vmatprep.subr.bf16.mxu0 0
  %758 = vmatpush1.bf16.msra.mxu0 0
  %759 = vmatprep.mubr.bf16.mxu0 0
  %760 = vmatmul.mubr.bf16.gmra.mrb[0].mxu0 %v250
  %v761 = vpop.f32.mrb[0].mxu0
  %v762 = vadd.f32 0.0, %v761
  %v763 = vpop.f32.mrb[0].mxu0
  %v764 = vpop.f32.mrb[0].mxu0
  %v765 = vadd.f32 0.0, %v764
  %v766 = vpop.f32.mrb[0].mxu0
  %767 = vmatprep.mubr.bf16.mxu0 0
  %768 = vmatmul.mubr.bf16.gmra.mrb[0].mxu0 %v253
  %v769 = vpop.f32.mrb[0].mxu0
  %v770 = vadd.f32 0.0, %v769
  %v771 = vpop.f32.mrb[0].mxu0
  %v772 = vpop.f32.mrb[0].mxu0
  %v773 = vadd.f32 0.0, %v772
  %v774 = vpop.f32.mrb[0].mxu0
  %775 = vmatprep.mubr.bf16.mxu0 0
  %776 = vmatmul.mubr.bf16.gmra.mrb[0].mxu0 %v256
  %v777 = vpop.f32.mrb[0].mxu0
  %v778 = vadd.f32 0.0, %v777
  %v779 = vpop.f32.mrb[0].mxu0
  %v780 = vpop.f32.mrb[0].mxu0
  %v781 = vadd.f32 0.0, %v780
  %v782 = vpop.f32.mrb[0].mxu0
  %783 = vmatprep.mubr.bf16.mxu0 0
  %784 = vmatmul.mubr.bf16.gmra.mrb[0].mxu0 %v259
  %v785 = vpop.f32.mrb[0].mxu0
  %v786 = vadd.f32 0.0, %v785
  %v787 = vpop.f32.mrb[0].mxu0
  %v788 = vpop.f32.mrb[0].mxu0
  %v789 = vadd.f32 0.0, %v788
  %v790 = vpop.f32.mrb[0].mxu0
  %791 = vdwg.mxu0
  %v792 = vmax.f32 %v762, 0.0
  %v793 = vmax.f32 %v765, 0.0
  %v794 = vmax.f32 %v770, 0.0
  %v795 = vmax.f32 %v773, 0.0
  %v796 = vmax.f32 %v778, 0.0
  %v797 = vmax.f32 %v781, 0.0
  %v798 = vmax.f32 %v786, 0.0
  %v799 = vmax.f32 %v789, 0.0
  %800 = vst [vmem:[#allocation2] sm:$0xff] %v792
  %801 = vst [vmem:[#allocation2 + $0x8] sm:$0xff] %v793
  %802 = vst [vmem:[#allocation2 + $0x10] sm:$0xff] %v794
  %803 = vst [vmem:[#allocation2 + $0x18] sm:$0xff] %v795
  %804 = vst [vmem:[#allocation2 + $0x20] sm:$0xff] %v796
  %805 = vst [vmem:[#allocation2 + $0x28] sm:$0xff] %v797
  %806 = vst [vmem:[#allocation2 + $0x30] sm:$0xff] %v798
  %807 = vst [vmem:[#allocation2 + $0x38] sm:$0xff] %v799
  %v808 = vld [vmem:[#allocation2] sm:$0xff]
  %v809 = vld [vmem:[#allocation2 + $0x8] sm:$0xff]
  %v810 = vld [vmem:[#allocation2 + $0x10] sm:$0xff]
  %v811 = vld [vmem:[#allocation2 + $0x18] sm:$0xff]
  %v812 = vld [vmem:[#allocation2 + $0x20] sm:$0xff]
  %v813 = vld [vmem:[#allocation2 + $0x28] sm:$0xff]
  %v814 = vld [vmem:[#allocation2 + $0x30] sm:$0xff]
  %v815 = vld [vmem:[#allocation2 + $0x38] sm:$0xff]
  %v816 = vpack.c.bf16 %v809, %v808
  %v817 = vpack.c.bf16 %v811, %v810
  %v818 = vpack.c.bf16 %v813, %v812
  %v819 = vpack.c.bf16 %v815, %v814
  %v820 = vld [vmem:[%s8] sm:$0xf]
  %v821 = vld [vmem:[%s8 + $0x4] sm:$0xf]
  %v822 = vld [vmem:[%s8 + $0x8] sm:$0xf]
  %v823 = vld [vmem:[%s8 + $0xc] sm:$0xf]
  %v824 = vld [vmem:[%s8 + $0x10] sm:$0xf]
  %v825 = vld [vmem:[%s8 + $0x14] sm:$0xf]
  %v826 = vld [vmem:[%s8 + $0x18] sm:$0xf]
  %v827 = vld [vmem:[%s8 + $0x1c] sm:$0xf]
  %v828 = vld [vmem:[%s8 + $0x20] sm:$0xf]
  %v829 = vld [vmem:[%s8 + $0x24] sm:$0xf]
  %v830 = vld [vmem:[%s8 + $0x28] sm:$0xf]
  %v831 = vld [vmem:[%s8 + $0x2c] sm:$0xf]
  %v832 = vld [vmem:[%s8 + $0x30] sm:$0xf]
  %v833 = vld [vmem:[%s8 + $0x34] sm:$0xf]
  %v834 = vld [vmem:[%s8 + $0x38] sm:$0xf]
  %v835 = vld [vmem:[%s8 + $0x3c] sm:$0xf]
  %v836 = vld [vmem:[%s9] sm:$0x1]
  %v838 = vlaneseq
  %v839 = vshrl.u32 %v838, 7
  %v840 = vsub.s32 0, %v839
  %v841 = vrot.slane %v836, %v840
  %v859 = vunpack.c.l.b16 %v820
  %v860 = vunpack.c.l.b16 %v821
  %v861 = vunpack.c.l.b16 %v822
  %v862 = vunpack.c.l.b16 %v823
  %v863 = vunpack.c.l.b16 %v824
  %v864 = vunpack.c.l.b16 %v825
  %v865 = vunpack.c.l.b16 %v826
  %v866 = vunpack.c.l.b16 %v827
  %v867 = vunpack.c.l.b16 %v828
  %v868 = vunpack.c.l.b16 %v829
  %v869 = vunpack.c.l.b16 %v830
  %v870 = vunpack.c.l.b16 %v831
  %v871 = vunpack.c.l.b16 %v832
  %v872 = vunpack.c.l.b16 %v833
  %v873 = vunpack.c.l.b16 %v834
  %v874 = vunpack.c.l.b16 %v835
  %v875 = vpack.c.b16 %v860, %v859
  %v876 = vpack.c.b16 %v862, %v861
  %v877 = vpack.c.b16 %v864, %v863
  %v878 = vpack.c.b16 %v866, %v865
  %v879 = vpack.c.b16 %v868, %v867
  %v880 = vpack.c.b16 %v870, %v869
  %v881 = vpack.c.b16 %v872, %v871
  %v882 = vpack.c.b16 %v874, %v873
  %891 = vmatprep.subr.bf16.mxu0 0
  %892 = vmatpush1.bf16.msra.mxu0 %v875
  %893 = vmatprep.subr.bf16.mxu0 0
  %894 = vmatpush1.bf16.msra.mxu0 %v876
  %895 = vmatprep.subr.bf16.mxu0 0
  %896 = vmatpush1.bf16.msra.mxu0 %v877
  %897 = vmatprep.subr.bf16.mxu0 0
  %898 = vmatpush1.bf16.msra.mxu0 %v878
  %899 = vmatprep.subr.bf16.mxu0 0
  %900 = vmatpush1.bf16.msra.mxu0 %v879
  %901 = vmatprep.subr.bf16.mxu0 0
  %902 = vmatpush1.bf16.msra.mxu0 %v880
  %903 = vmatprep.subr.bf16.mxu0 0
  %904 = vmatpush1.bf16.msra.mxu0 %v881
  %905 = vmatprep.subr.bf16.mxu0 0
  %906 = vmatpush1.bf16.msra.mxu0 %v882
  %907 = vmatprep.subr.bf16.mxu0 0
  %908 = vmatpush1.bf16.msra.mxu0 0
  %909 = vmatprep.subr.bf16.mxu0 0
  %910 = vmatpush1.bf16.msra.mxu0 0
  %911 = vmatprep.subr.bf16.mxu0 0
  %912 = vmatpush1.bf16.msra.mxu0 0
  %913 = vmatprep.subr.bf16.mxu0 0
  %914 = vmatpush1.bf16.msra.mxu0 0
  %915 = vmatprep.subr.bf16.mxu0 0
  %916 = vmatpush1.bf16.msra.mxu0 0
  %917 = vmatprep.subr.bf16.mxu0 0
  %918 = vmatpush1.bf16.msra.mxu0 0
  %919 = vmatprep.subr.bf16.mxu0 0
  %920 = vmatpush1.bf16.msra.mxu0 0
  %921 = vmatprep.subr.bf16.mxu0 0
  %922 = vmatpush1.bf16.msra.mxu0 0
  %923 = vmatprep.mubr.bf16.mxu0 0
  %924 = vmatmul.mubr.bf16.gmra.mrb[0].mxu0 %v816
  %v925 = vpop.f32.mrb[0].mxu0
  %v926 = vadd.f32 %v841, %v925
  %v927 = vpop.f32.mrb[0].mxu0
  %v928 = vpop.f32.mrb[0].mxu0
  %v929 = vadd.f32 %v841, %v928
  %v930 = vpop.f32.mrb[0].mxu0
  %931 = vmatprep.mubr.bf16.mxu0 0
  %932 = vmatmul.mubr.bf16.gmra.mrb[0].mxu0 %v817
  %v933 = vpop.f32.mrb[0].mxu0
  %v934 = vadd.f32 %v841, %v933
  %v935 = vpop.f32.mrb[0].mxu0
  %v936 = vpop.f32.mrb[0].mxu0
  %v937 = vadd.f32 %v841, %v936
  %v938 = vpop.f32.mrb[0].mxu0
  %939 = vmatprep.mubr.bf16.mxu0 0
  %940 = vmatmul.mubr.bf16.gmra.mrb[0].mxu0 %v818
  %v941 = vpop.f32.mrb[0].mxu0
  %v942 = vadd.f32 %v841, %v941
  %v943 = vpop.f32.mrb[0].mxu0
  %v944 = vpop.f32.mrb[0].mxu0
  %v945 = vadd.f32 %v841, %v944
  %v946 = vpop.f32.mrb[0].mxu0
  %947 = vmatprep.mubr.bf16.mxu0 0
  %948 = vmatmul.mubr.bf16.gmra.mrb[0].mxu0 %v819
  %v949 = vpop.f32.mrb[0].mxu0
  %v950 = vadd.f32 %v841, %v949
  %v951 = vpop.f32.mrb[0].mxu0
  %v952 = vpop.f32.mrb[0].mxu0
  %v953 = vadd.f32 %v841, %v952
  %v954 = vpop.f32.mrb[0].mxu0
  %955 = vdwg.mxu0
  %v956 = vmax.f32 %v926, 0.0
  %v957 = vmax.f32 %v929, 0.0
  %v958 = vmax.f32 %v934, 0.0
  %v959 = vmax.f32 %v937, 0.0
  %v960 = vmax.f32 %v942, 0.0
  %v961 = vmax.f32 %v945, 0.0
  %v962 = vmax.f32 %v950, 0.0
  %v963 = vmax.f32 %v953, 0.0
  %964 = vst [vmem:[#allocation3] sm:$0xff] %v956
  %965 = vst [vmem:[#allocation3 + $0x8] sm:$0xff] %v957
  %966 = vst [vmem:[#allocation3 + $0x10] sm:$0xff] %v958
  %967 = vst [vmem:[#allocation3 + $0x18] sm:$0xff] %v959
  %968 = vst [vmem:[#allocation3 + $0x20] sm:$0xff] %v960
  %969 = vst [vmem:[#allocation3 + $0x28] sm:$0xff] %v961
  %970 = vst [vmem:[#allocation3 + $0x30] sm:$0xff] %v962
  %971 = vst [vmem:[#allocation3 + $0x38] sm:$0xff] %v963
  %v972 = vld [vmem:[#allocation3] sm:$0xff]
  %v973 = vld [vmem:[#allocation3 + $0x8] sm:$0xff]
  %v974 = vld [vmem:[#allocation3 + $0x10] sm:$0xff]
  %v975 = vld [vmem:[#allocation3 + $0x18] sm:$0xff]
  %v976 = vld [vmem:[#allocation3 + $0x20] sm:$0xff]
  %v977 = vld [vmem:[#allocation3 + $0x28] sm:$0xff]
  %v978 = vld [vmem:[#allocation3 + $0x30] sm:$0xff]
  %v979 = vld [vmem:[#allocation3 + $0x38] sm:$0xff]
  %v980 = vpack.c.bf16 %v973, %v972
  %v981 = vpack.c.bf16 %v975, %v974
  %v982 = vpack.c.bf16 %v977, %v976
  %v983 = vpack.c.bf16 %v979, %v978
  %v984 = vld [vmem:[%s10] sm:$0xf]
  %v985 = vld [vmem:[%s10 + $0x4] sm:$0xf]
  %v986 = vld [vmem:[%s10 + $0x8] sm:$0xf]
  %v987 = vld [vmem:[%s10 + $0xc] sm:$0xf]
  %v988 = vld [vmem:[%s10 + $0x10] sm:$0xf]
  %v989 = vld [vmem:[%s10 + $0x14] sm:$0xf]
  %v990 = vld [vmem:[%s10 + $0x18] sm:$0xf]
  %v991 = vld [vmem:[%s10 + $0x1c] sm:$0xf]
  %v992 = vld [vmem:[%s10 + $0x20] sm:$0xf]
  %v993 = vld [vmem:[%s10 + $0x24] sm:$0xf]
  %v994 = vld [vmem:[%s10 + $0x28] sm:$0xf]
  %v995 = vld [vmem:[%s10 + $0x2c] sm:$0xf]
  %v996 = vld [vmem:[%s10 + $0x30] sm:$0xf]
  %v997 = vld [vmem:[%s10 + $0x34] sm:$0xf]
  %v998 = vld [vmem:[%s10 + $0x38] sm:$0xf]
  %v999 = vld [vmem:[%s10 + $0x3c] sm:$0xf]
  %v1000 = vld [vmem:[%s11] sm:$0x1]
  %v1002 = vlaneseq
  %v1003 = vshrl.u32 %v1002, 7
  %v1004 = vsub.s32 0, %v1003
  %v1005 = vrot.slane %v1000, %v1004
  %v1023 = vunpack.c.l.b16 %v984
  %v1024 = vunpack.c.l.b16 %v985
  %v1025 = vunpack.c.l.b16 %v986
  %v1026 = vunpack.c.l.b16 %v987
  %v1027 = vunpack.c.l.b16 %v988
  %v1028 = vunpack.c.l.b16 %v989
  %v1029 = vunpack.c.l.b16 %v990
  %v1030 = vunpack.c.l.b16 %v991
  %v1031 = vunpack.c.l.b16 %v992
  %v1032 = vunpack.c.l.b16 %v993
  %v1033 = vunpack.c.l.b16 %v994
  %v1034 = vunpack.c.l.b16 %v995
  %v1035 = vunpack.c.l.b16 %v996
  %v1036 = vunpack.c.l.b16 %v997
  %v1037 = vunpack.c.l.b16 %v998
  %v1038 = vunpack.c.l.b16 %v999
  %v1039 = vpack.c.b16 %v1024, %v1023
  %v1040 = vpack.c.b16 %v1026, %v1025
  %v1041 = vpack.c.b16 %v1028, %v1027
  %v1042 = vpack.c.b16 %v1030, %v1029
  %v1043 = vpack.c.b16 %v1032, %v1031
  %v1044 = vpack.c.b16 %v1034, %v1033
  %v1045 = vpack.c.b16 %v1036, %v1035
  %v1046 = vpack.c.b16 %v1038, %v1037
  %1055 = vmatprep.subr.bf16.mxu0 0
  %1056 = vmatpush1.bf16.msra.mxu0 %v1039
  %1057 = vmatprep.subr.bf16.mxu0 0
  %1058 = vmatpush1.bf16.msra.mxu0 %v1040
  %1059 = vmatprep.subr.bf16.mxu0 0
  %1060 = vmatpush1.bf16.msra.mxu0 %v1041
  %1061 = vmatprep.subr.bf16.mxu0 0
  %1062 = vmatpush1.bf16.msra.mxu0 %v1042
  %1063 = vmatprep.subr.bf16.mxu0 0
  %1064 = vmatpush1.bf16.msra.mxu0 %v1043
  %1065 = vmatprep.subr.bf16.mxu0 0
  %1066 = vmatpush1.bf16.msra.mxu0 %v1044
  %1067 = vmatprep.subr.bf16.mxu0 0
  %1068 = vmatpush1.bf16.msra.mxu0 %v1045
  %1069 = vmatprep.subr.bf16.mxu0 0
  %1070 = vmatpush1.bf16.msra.mxu0 %v1046
  %1071 = vmatprep.subr.bf16.mxu0 0
  %1072 = vmatpush1.bf16.msra.mxu0 0
  %1073 = vmatprep.subr.bf16.mxu0 0
  %1074 = vmatpush1.bf16.msra.mxu0 0
  %1075 = vmatprep.subr.bf16.mxu0 0
  %1076 = vmatpush1.bf16.msra.mxu0 0
  %1077 = vmatprep.subr.bf16.mxu0 0
  %1078 = vmatpush1.bf16.msra.mxu0 0
  %1079 = vmatprep.subr.bf16.mxu0 0
  %1080 = vmatpush1.bf16.msra.mxu0 0
  %1081 = vmatprep.subr.bf16.mxu0 0
  %1082 = vmatpush1.bf16.msra.mxu0 0
  %1083 = vmatprep.subr.bf16.mxu0 0
  %1084 = vmatpush1.bf16.msra.mxu0 0
  %1085 = vmatprep.subr.bf16.mxu0 0
  %1086 = vmatpush1.bf16.msra.mxu0 0
  %1087 = vmatprep.mubr.bf16.mxu0 0
  %1088 = vmatmul.mubr.bf16.gmra.mrb[0].mxu0 %v980
  %v1089 = vpop.f32.mrb[0].mxu0
  %v1090 = vadd.f32 %v1005, %v1089
  %v1091 = vpop.f32.mrb[0].mxu0
  %v1092 = vpop.f32.mrb[0].mxu0
  %v1093 = vadd.f32 %v1005, %v1092
  %v1094 = vpop.f32.mrb[0].mxu0
  %1095 = vmatprep.mubr.bf16.mxu0 0
  %1096 = vmatmul.mubr.bf16.gmra.mrb[0].mxu0 %v981
  %v1097 = vpop.f32.mrb[0].mxu0
  %v1098 = vadd.f32 %v1005, %v1097
  %v1099 = vpop.f32.mrb[0].mxu0
  %v1100 = vpop.f32.mrb[0].mxu0
  %v1101 = vadd.f32 %v1005, %v1100
  %v1102 = vpop.f32.mrb[0].mxu0
  %1103 = vmatprep.mubr.bf16.mxu0 0
  %1104 = vmatmul.mubr.bf16.gmra.mrb[0].mxu0 %v982
  %v1105 = vpop.f32.mrb[0].mxu0
  %v1106 = vadd.f32 %v1005, %v1105
  %v1107 = vpop.f32.mrb[0].mxu0
  %v1108 = vpop.f32.mrb[0].mxu0
  %v1109 = vadd.f32 %v1005, %v1108
  %v1110 = vpop.f32.mrb[0].mxu0
  %1111 = vmatprep.mubr.bf16.mxu0 0
  %1112 = vmatmul.mubr.bf16.gmra.mrb[0].mxu0 %v983
  %v1113 = vpop.f32.mrb[0].mxu0
  %v1114 = vadd.f32 %v1005, %v1113
  %v1115 = vpop.f32.mrb[0].mxu0
  %v1116 = vpop.f32.mrb[0].mxu0
  %v1117 = vadd.f32 %v1005, %v1116
  %v1118 = vpop.f32.mrb[0].mxu0
  %1119 = vdwg.mxu0
  %v1120 = vmax.f32 %v1090, 0.0
  %v1121 = vmax.f32 %v1093, 0.0
  %v1122 = vmax.f32 %v1098, 0.0
  %v1123 = vmax.f32 %v1101, 0.0
  %v1124 = vmax.f32 %v1106, 0.0
  %v1125 = vmax.f32 %v1109, 0.0
  %v1126 = vmax.f32 %v1114, 0.0
  %v1127 = vmax.f32 %v1117, 0.0
  %1128 = vst [vmem:[#allocation2] sm:$0xff] %v1120
  %1129 = vst [vmem:[#allocation2 + $0x8] sm:$0xff] %v1121
  %1130 = vst [vmem:[#allocation2 + $0x10] sm:$0xff] %v1122
  %1131 = vst [vmem:[#allocation2 + $0x18] sm:$0xff] %v1123
  %1132 = vst [vmem:[#allocation2 + $0x20] sm:$0xff] %v1124
  %1133 = vst [vmem:[#allocation2 + $0x28] sm:$0xff] %v1125
  %1134 = vst [vmem:[#allocation2 + $0x30] sm:$0xff] %v1126
  %1135 = vst [vmem:[#allocation2 + $0x38] sm:$0xff] %v1127
  %v1136 = vld [vmem:[#allocation2] sm:$0xff]
  %v1137 = vld [vmem:[#allocation2 + $0x8] sm:$0xff]
  %v1138 = vld [vmem:[#allocation2 + $0x10] sm:$0xff]
  %v1139 = vld [vmem:[#allocation2 + $0x18] sm:$0xff]
  %v1140 = vld [vmem:[#allocation2 + $0x20] sm:$0xff]
  %v1141 = vld [vmem:[#allocation2 + $0x28] sm:$0xff]
  %v1142 = vld [vmem:[#allocation2 + $0x30] sm:$0xff]
  %v1143 = vld [vmem:[#allocation2 + $0x38] sm:$0xff]
  %v1144 = vpack.c.bf16 %v1137, %v1136
  %v1145 = vpack.c.bf16 %v1139, %v1138
  %v1146 = vpack.c.bf16 %v1141, %v1140
  %v1147 = vpack.c.bf16 %v1143, %v1142
  %v1148 = vld [vmem:[%s12] sm:$0xf]
  %v1149 = vld [vmem:[%s12 + $0x4] sm:$0xf]
  %v1150 = vld [vmem:[%s12 + $0x8] sm:$0xf]
  %v1151 = vld [vmem:[%s12 + $0xc] sm:$0xf]
  %v1152 = vld [vmem:[%s12 + $0x10] sm:$0xf]
  %v1153 = vld [vmem:[%s12 + $0x14] sm:$0xf]
  %v1154 = vld [vmem:[%s12 + $0x18] sm:$0xf]
  %v1155 = vld [vmem:[%s12 + $0x1c] sm:$0xf]
  %v1156 = vld [vmem:[%s12 + $0x20] sm:$0xf]
  %v1157 = vld [vmem:[%s12 + $0x24] sm:$0xf]
  %v1158 = vld [vmem:[%s12 + $0x28] sm:$0xf]
  %v1159 = vld [vmem:[%s12 + $0x2c] sm:$0xf]
  %v1160 = vld [vmem:[%s12 + $0x30] sm:$0xf]
  %v1161 = vld [vmem:[%s12 + $0x34] sm:$0xf]
  %v1162 = vld [vmem:[%s12 + $0x38] sm:$0xf]
  %v1163 = vld [vmem:[%s12 + $0x3c] sm:$0xf]
  %v1164 = vld [vmem:[%s13] sm:$0x1]
  %v1166 = vlaneseq
  %v1167 = vshrl.u32 %v1166, 7
  %v1168 = vsub.s32 0, %v1167
  %v1169 = vrot.slane %v1164, %v1168
  %v1187 = vunpack.c.l.b16 %v1148
  %v1188 = vunpack.c.l.b16 %v1149
  %v1189 = vunpack.c.l.b16 %v1150
  %v1190 = vunpack.c.l.b16 %v1151
  %v1191 = vunpack.c.l.b16 %v1152
  %v1192 = vunpack.c.l.b16 %v1153
  %v1193 = vunpack.c.l.b16 %v1154
  %v1194 = vunpack.c.l.b16 %v1155
  %v1195 = vunpack.c.l.b16 %v1156
  %v1196 = vunpack.c.l.b16 %v1157
  %v1197 = vunpack.c.l.b16 %v1158
  %v1198 = vunpack.c.l.b16 %v1159
  %v1199 = vunpack.c.l.b16 %v1160
  %v1200 = vunpack.c.l.b16 %v1161
  %v1201 = vunpack.c.l.b16 %v1162
  %v1202 = vunpack.c.l.b16 %v1163
  %v1203 = vpack.c.b16 %v1188, %v1187
  %v1204 = vpack.c.b16 %v1190, %v1189
  %v1205 = vpack.c.b16 %v1192, %v1191
  %v1206 = vpack.c.b16 %v1194, %v1193
  %v1207 = vpack.c.b16 %v1196, %v1195
  %v1208 = vpack.c.b16 %v1198, %v1197
  %v1209 = vpack.c.b16 %v1200, %v1199
  %v1210 = vpack.c.b16 %v1202, %v1201
  %1219 = vmatprep.subr.bf16.mxu0 0
  %1220 = vmatpush1.bf16.msra.mxu0 %v1203
  %1221 = vmatprep.subr.bf16.mxu0 0
  %1222 = vmatpush1.bf16.msra.mxu0 %v1204
  %1223 = vmatprep.subr.bf16.mxu0 0
  %1224 = vmatpush1.bf16.msra.mxu0 %v1205
  %1225 = vmatprep.subr.bf16.mxu0 0
  %1226 = vmatpush1.bf16.msra.mxu0 %v1206
  %1227 = vmatprep.subr.bf16.mxu0 0
  %1228 = vmatpush1.bf16.msra.mxu0 %v1207
  %1229 = vmatprep.subr.bf16.mxu0 0
  %1230 = vmatpush1.bf16.msra.mxu0 %v1208
  %1231 = vmatprep.subr.bf16.mxu0 0
  %1232 = vmatpush1.bf16.msra.mxu0 %v1209
  %1233 = vmatprep.subr.bf16.mxu0 0
  %1234 = vmatpush1.bf16.msra.mxu0 %v1210
  %1235 = vmatprep.subr.bf16.mxu0 0
  %1236 = vmatpush1.bf16.msra.mxu0 0
  %1237 = vmatprep.subr.bf16.mxu0 0
  %1238 = vmatpush1.bf16.msra.mxu0 0
  %1239 = vmatprep.subr.bf16.mxu0 0
  %1240 = vmatpush1.bf16.msra.mxu0 0
  %1241 = vmatprep.subr.bf16.mxu0 0
  %1242 = vmatpush1.bf16.msra.mxu0 0
  %1243 = vmatprep.subr.bf16.mxu0 0
  %1244 = vmatpush1.bf16.msra.mxu0 0
  %1245 = vmatprep.subr.bf16.mxu0 0
  %1246 = vmatpush1.bf16.msra.mxu0 0
  %1247 = vmatprep.subr.bf16.mxu0 0
  %1248 = vmatpush1.bf16.msra.mxu0 0
  %1249 = vmatprep.subr.bf16.mxu0 0
  %1250 = vmatpush1.bf16.msra.mxu0 0
  %1251 = vmatprep.mubr.bf16.mxu0 0
  %1252 = vmatmul.mubr.bf16.gmra.mrb[0].mxu0 %v1144
  %v1253 = vpop.f32.mrb[0].mxu0
  %v1254 = vadd.f32 %v1169, %v1253
  %v1255 = vpop.f32.mrb[0].mxu0
  %v1256 = vpop.f32.mrb[0].mxu0
  %v1257 = vadd.f32 %v1169, %v1256
  %v1258 = vpop.f32.mrb[0].mxu0
  %1259 = vmatprep.mubr.bf16.mxu0 0
  %1260 = vmatmul.mubr.bf16.gmra.mrb[0].mxu0 %v1145
  %v1261 = vpop.f32.mrb[0].mxu0
  %v1262 = vadd.f32 %v1169, %v1261
  %v1263 = vpop.f32.mrb[0].mxu0
  %v1264 = vpop.f32.mrb[0].mxu0
  %v1265 = vadd.f32 %v1169, %v1264
  %v1266 = vpop.f32.mrb[0].mxu0
  %1267 = vmatprep.mubr.bf16.mxu0 0
  %1268 = vmatmul.mubr.bf16.gmra.mrb[0].mxu0 %v1146
  %v1269 = vpop.f32.mrb[0].mxu0
  %v1270 = vadd.f32 %v1169, %v1269
  %v1271 = vpop.f32.mrb[0].mxu0
  %v1272 = vpop.f32.mrb[0].mxu0
  %v1273 = vadd.f32 %v1169, %v1272
  %v1274 = vpop.f32.mrb[0].mxu0
  %1275 = vmatprep.mubr.bf16.mxu0 0
  %1276 = vmatmul.mubr.bf16.gmra.mrb[0].mxu0 %v1147
  %v1277 = vpop.f32.mrb[0].mxu0
  %v1278 = vadd.f32 %v1169, %v1277
  %v1279 = vpop.f32.mrb[0].mxu0
  %v1280 = vpop.f32.mrb[0].mxu0
  %v1281 = vadd.f32 %v1169, %v1280
  %v1282 = vpop.f32.mrb[0].mxu0
  %1283 = vdwg.mxu0
  %1284 = vst [vmem:[%s14] sm:$0xff] %v1254
  %1285 = vst [vmem:[%s14 + $0x8] sm:$0xff] %v1257
  %1286 = vst [vmem:[%s14 + $0x10] sm:$0xff] %v1262
  %1287 = vst [vmem:[%s14 + $0x18] sm:$0xff] %v1265
  %1288 = vst [vmem:[%s14 + $0x20] sm:$0xff] %v1270
  %1289 = vst [vmem:[%s14 + $0x28] sm:$0xff] %v1273
  %1290 = vst [vmem:[%s14 + $0x30] sm:$0xff] %v1278
  %1291 = vst [vmem:[%s14 + $0x38] sm:$0xff] %v1281
  // Predicated region
  $region58: #{gcn_forward.1} parent=0 // pred_check
    _
  $region59: #{gcn_forward.1} parent=0 // pred_check_branch
    %1293 = sbr.rel (0) target = $region61
  $region60: #{gcn_forward.1} parent=0 // pred_region
    _
  $region61: #{gcn_forward.1} parent=0 // pred_fallthru
    _
  // Predicated region
  $region62: #{gcn_forward.1} parent=0 // pred_check
    _
  $region63: #{gcn_forward.1} parent=0 // pred_check_branch
    %1295 = sbr.rel (0) target = $region65
  $region64: #{gcn_forward.1} parent=0 // pred_region
    _
  $region65: #{gcn_forward.1} parent=0 // pred_fallthru
    _

</llo_original>
